<compile_context>
chip_gen: v7x
topology: tpu7x:2x2x1
jax: 0.10.0
libtpu: 0.0.40
codegen_flags: <defaults>
</compile_context>

<pallas_src>
import jax
import jax.numpy as jnp
from jax import lax
from jax.experimental import pallas as pl
from jax.experimental.pallas import tpu as pltpu

NUM_NODES = 64
IN_C = 2
KH = KW = 4
IN_H, IN_W = 6, 7
OH, OW = IN_H - KH + 1, IN_W - KW + 1      # 3, 4
NPOS = OH * OW                             # 12 conv output positions
KPATCH = IN_C * KH * KW                    # 32 taps per position
FLAT = NPOS * NUM_NODES                    # 768 flattened conv features
POS_PER_GRP = 4                            # 4 positions * 32 taps = 128 lanes
NGRP = NPOS // POS_PER_GRP                 # 3 K groups
GK = POS_PER_GRP * KPATCH                  # 128-wide K slice of patches
GN = POS_PER_GRP * NUM_NODES               # 256-wide activation slice
NEG_SLOPE = 0.01                           # nn.LeakyReLU default
MM_DTYPE = jnp.bfloat16                    # MXU operand dtype


def _leaky(x):
    return jnp.where(x >= 0, x, NEG_SLOPE * x)


def arch1_kernel(p_ref, wblk_ref, cb_ref, w1_ref, b1_ref, w2_ref, b2_ref,
                 w3_ref, b3_ref, out_ref):
    # p_ref:    (TB, 384) bf16 im2col patches, (pos, cin, kh, kw) order
    # wblk_ref: (128, 256) bf16 block-diagonal conv weight (4 positions/group)
    # cb_ref:   (1, 256)  f32 conv bias tiled over 4 positions
    # w1_ref:   (3, 256, 64) bf16 fc1, rows regrouped to (pos, channel) order
    # w2/b2:    (64, 64) bf16 / (1, 64) f32
    # w3/b3:    (1, 64) f32  / (1, 1) f32
    tb = p_ref.shape[0]
    wblk = wblk_ref[...]
    cb = cb_ref[...]

    # Fused conv (3 block matmuls on the MXU) + fc1 K-group accumulation.
    # Only a (TB, 256) activation tile is live per group.
    h1 = jnp.zeros((tb, NUM_NODES), jnp.float32)
    for g in range(NGRP):                                   # static, unrolled
        pg = p_ref[:, g * GK:(g + 1) * GK]                  # (TB, 128) bf16
        a = jnp.dot(pg, wblk, preferred_element_type=jnp.float32)  # (TB, 256)
        a = _leaky(a + cb)
        w1g = w1_ref[g]                                     # (256, 64) bf16
        h1 = h1 + jnp.dot(a.astype(w1g.dtype), w1g,
                          preferred_element_type=jnp.float32)

    # Linear(768 -> 64) bias + LeakyReLU.
    h1 = _leaky(h1 + b1_ref[...])

    # Linear(64 -> 64) + LeakyReLU.
    w2 = w2_ref[...]
    h2 = _leaky(jnp.dot(h1.astype(w2.dtype), w2,
                        preferred_element_type=jnp.float32) + b2_ref[...])

    # Linear(64 -> 1) + Tanh as VPU multiply + lane reduction (no N=1 matmul).
    z3 = jnp.sum(h2 * w3_ref[...], axis=-1, keepdims=True) + b3_ref[...]
    out_ref[...] = jnp.tanh(z3)


def prepare_params(params, mm_dtype=MM_DTYPE):
    """One-time re-layout / cast of PyTorch-style parameters into kernel layouts."""
    cw, cb, w1, b1, w2, b2, w3, b3 = params
    # (Cout, Cin, KH, KW) -> (32, 64); row index k = cin*16 + kh*4 + kw.
    cw_flat = cw.reshape(NUM_NODES, KPATCH).T
    # One (128, 256) block-diagonal weight reused by all 3 K groups:
    # rows [q*32,(q+1)*32) feed cols [q*64,(q+1)*64), q in [0,4).
    wblk = jnp.einsum('pq,ko->pkqo', jnp.eye(POS_PER_GRP, dtype=cw.dtype), cw_flat)
    wblk = wblk.reshape(GK, GN)
    cb_rep = jnp.tile(cb, POS_PER_GRP).reshape(1, GN)
    # w1 rows follow PyTorch Flatten(C,H,W) order (c*12 + p); regroup to (p, c)
    # and split along K into 3 groups of 256 rows.
    w1_hwc = jnp.transpose(w1.reshape(NUM_NODES, NPOS, NUM_NODES),
                           (1, 0, 2)).reshape(FLAT, NUM_NODES)
    w1_grp = w1_hwc.reshape(NGRP, GN, NUM_NODES)
    return (wblk.astype(mm_dtype), cb_rep, w1_grp.astype(mm_dtype),
            b1.reshape(1, -1), w2.astype(mm_dtype), b2.reshape(1, -1),
            w3.reshape(1, NUM_NODES), b3.reshape(1, 1))


def _im2col(x):
    """(B, 2, 6, 7) NCHW -> (B, 384) patches in (pos, cin, kh, kw) order."""
    B = x.shape[0]
    cols = []
    for h in range(OH):
        for w in range(OW):
            cols.append(x[:, :, h:h + KH, w:w + KW].reshape(B, KPATCH))
    return jnp.concatenate(cols, axis=1)


def _round_up(n, m):
    return ((n + m - 1) // m) * m


def _choose_tb(batch):
    """Batch tile: big enough to amortize ~0.35us/step, but keep >=2 grid steps
    when the batch allows it (v7x megacore sharding + pipeline overlap)."""
    b8 = _round_up(batch, 8)
    if b8 <= 256:
        return b8
    for cand in (1024, 512, 256):
        if b8 >= 2 * cand:
            return cand
    return 256


def architecture1_forward(x, prepped, tb=None):
    wblk, cb_rep, w1_grp, b1, w2, b2, w3row, b3 = prepped
    B = x.shape[0]
    if tb is None:
        tb = _choose_tb(B)
    tb = max(8, _round_up(min(tb, _round_up(B, 8)), 8))
    b_pad = _round_up(B, tb)

    # Layout plumbing (pure JAX glue): lane-dense bf16 patches slab.
    patches = _im2col(x.astype(MM_DTYPE))
    if b_pad != B:
        patches = jnp.pad(patches, ((0, b_pad - B), (0, 0)))

    weight_args = (wblk, cb_rep, w1_grp, b1, w2, b2, w3row, b3)
    weight_specs = [
        pl.BlockSpec(wa.shape, lambda i, _n=wa.ndim: (0,) * _n)
        for wa in weight_args
    ]

    out = pl.pallas_call(
        arch1_kernel,
        out_shape=jax.ShapeDtypeStruct((b_pad, 1), jnp.float32),
        grid_spec=pltpu.PrefetchScalarGridSpec(
            num_scalar_prefetch=0,
            grid=(b_pad // tb,),
            in_specs=[pl.BlockSpec((tb, NGRP * GK), lambda i: (i, 0))]
                     + weight_specs,
            out_specs=pl.BlockSpec((tb, 1), lambda i: (i, 0)),
        ),
        compiler_params=pltpu.CompilerParams(
            dimension_semantics=("parallel",),
            vmem_limit_bytes=32 * 1024 * 1024,
        ),
    )(patches, *weight_args)
    return out[:B]


def init_params(key):
    ks = jax.random.split(key, 8)
    cw = 0.10 * jax.random.normal(ks[0], (NUM_NODES, IN_C, KH, KW), jnp.float32)
    cb = 0.10 * jax.random.normal(ks[1], (NUM_NODES,), jnp.float32)
    w1 = 0.05 * jax.random.normal(ks[2], (NUM_NODES * OH * OW, NUM_NODES), jnp.float32)
    b1 = 0.10 * jax.random.normal(ks[3], (NUM_NODES,), jnp.float32)
    w2 = 0.10 * jax.random.normal(ks[4], (NUM_NODES, NUM_NODES), jnp.float32)
    b2 = 0.10 * jax.random.normal(ks[5], (NUM_NODES,), jnp.float32)
    w3 = 0.10 * jax.random.normal(ks[6], (NUM_NODES, 1), jnp.float32)
    b3 = 0.10 * jax.random.normal(ks[7], (1,), jnp.float32)
    return (cw, cb, w1, b1, w2, b2, w3, b3)


def reference_forward(x, params):
    """Pure-JAX f32 reference replicating the PyTorch forward exactly."""
    cw, cb, w1, b1, w2, b2, w3, b3 = params
    y = lax.conv_general_dilated(x, cw, (1, 1), 'VALID',
                                 dimension_numbers=('NCHW', 'OIHW', 'NCHW'))
    y = y + cb[None, :, None, None]
    y = _leaky(y)
    flat = y.reshape(x.shape[0], -1)              # PyTorch Flatten(C, H, W) order
    h1 = _leaky(flat @ w1 + b1)
    h2 = _leaky(h1 @ w2 + b2)
    return jnp.tanh(h2 @ w3 + b3)


if __name__ == "__main__":
    key = jax.random.PRNGKey(0)
    k_x, k_p = jax.random.split(key)
    B = 2
    x = jax.random.normal(k_x, (B, IN_C, IN_H, IN_W), jnp.float32)
    params = init_params(k_p)
    prepped = prepare_params(params)               # hoisted, run once

    fwd = jax.jit(architecture1_forward, static_argnames=("tb",))
    out = jax.block_until_ready(fwd(x, prepped))

    ref = reference_forward(x, params)
    assert out.shape == (B, 1)
    # bf16 MXU operands -> looser tolerance than the f32 reference.
    assert jnp.allclose(out, ref, atol=3e-2, rtol=3e-2), (out, ref)
    print("KERNEL_OK")
</pallas_src>

<mosaic_0001>
module attributes {stable_mosaic.version = 11 : i64} {
  func.func @arch1_kernel(%arg0: i32, %arg1: memref<8x384xbf16, #tpu.memory_space<vmem>>, %arg2: memref<128x256xbf16, #tpu.memory_space<vmem>>, %arg3: memref<1x256xf32, #tpu.memory_space<vmem>>, %arg4: memref<3x256x64xbf16, #tpu.memory_space<vmem>>, %arg5: memref<1x64xf32, #tpu.memory_space<vmem>>, %arg6: memref<64x64xbf16, #tpu.memory_space<vmem>>, %arg7: memref<1x64xf32, #tpu.memory_space<vmem>>, %arg8: memref<1x64xf32, #tpu.memory_space<vmem>>, %arg9: memref<1x1xf32, #tpu.memory_space<vmem>>, %arg10: memref<8x1xf32, #tpu.memory_space<vmem>>) attributes {dimension_semantics = [#tpu.dimension_semantics<parallel>], iteration_bounds = array<i64: 1>, scalar_prefetch = 0 : i64, scratch_operands = 0 : i64, tpu.core_type = #tpu.core_type<tc>, window_params = [{transform_indices = @transform_0, window_bounds = array<i64: 8, 384>}, {pipeline_mode = #tpu.pipeline_mode<synchronous>, transform_indices = @transform_1, window_bounds = array<i64: 128, 256>}, {pipeline_mode = #tpu.pipeline_mode<synchronous>, transform_indices = @transform_2, window_bounds = array<i64: 1, 256>}, {pipeline_mode = #tpu.pipeline_mode<synchronous>, transform_indices = @transform_3, window_bounds = array<i64: 3, 256, 64>}, {pipeline_mode = #tpu.pipeline_mode<synchronous>, transform_indices = @transform_4, window_bounds = array<i64: 1, 64>}, {pipeline_mode = #tpu.pipeline_mode<synchronous>, transform_indices = @transform_5, window_bounds = array<i64: 64, 64>}, {pipeline_mode = #tpu.pipeline_mode<synchronous>, transform_indices = @transform_6, window_bounds = array<i64: 1, 64>}, {pipeline_mode = #tpu.pipeline_mode<synchronous>, transform_indices = @transform_7, window_bounds = array<i64: 1, 64>}, {pipeline_mode = #tpu.pipeline_mode<synchronous>, transform_indices = @transform_8, window_bounds = array<i64: 1, 1>}, {transform_indices = @transform_9, window_bounds = array<i64: 8, 1>}]} {
    %c0 = arith.constant 0 : index
    %c0_0 = arith.constant 0 : index
    %0 = vector.load %arg2[%c0, %c0_0] : memref<128x256xbf16, #tpu.memory_space<vmem>>, vector<128x256xbf16>
    %c0_1 = arith.constant 0 : index
    %c0_2 = arith.constant 0 : index
    %1 = vector.load %arg3[%c0_1, %c0_2] : memref<1x256xf32, #tpu.memory_space<vmem>>, vector<1x256xf32>
    %cst = arith.constant 0.000000e+00 : f32
    %2 = vector.broadcast %cst : f32 to vector<8x64xf32>
    %c0_3 = arith.constant 0 : index
    %c0_4 = arith.constant 0 : index
    %3 = vector.load %arg1[%c0_3, %c0_4] : memref<8x384xbf16, #tpu.memory_space<vmem>>, vector<8x128xbf16>
    %cst_5 = arith.constant dense<0.000000e+00> : vector<8x256xf32>
    %4 = tpu.matmul %3, %0, %cst_5 {dimension_numbers = #tpu.dot_dimension_numbers<[1], [0], [0], [1], [0, 0, 1, 1], [], []>} : vector<8x128xbf16>, vector<128x256xbf16>, vector<8x256xf32> -> vector<8x256xf32>
    %5 = vector.broadcast %1 : vector<1x256xf32> to vector<8x256xf32>
    %6 = arith.addf %4, %5 : vector<8x256xf32>
    %cst_6 = arith.constant 0.000000e+00 : f32
    %7 = vector.broadcast %cst_6 : f32 to vector<8x256xf32>
    %8 = arith.cmpf oge, %6, %7 : vector<8x256xf32>
    %cst_7 = arith.constant 0.00999999977 : f32
    %9 = vector.broadcast %cst_7 : f32 to vector<8x256xf32>
    %10 = arith.mulf %9, %6 : vector<8x256xf32>
    %11 = arith.select %8, %6, %10 : vector<8x256xi1>, vector<8x256xf32>
    %c0_8 = arith.constant 0 : index
    %c0_9 = arith.constant 0 : index
    %c0_10 = arith.constant 0 : index
    %12 = vector.load %arg4[%c0_8, %c0_9, %c0_10] : memref<3x256x64xbf16, #tpu.memory_space<vmem>>, vector<1x256x64xbf16>
    %13 = vector.shape_cast %12 : vector<1x256x64xbf16> to vector<256x64xbf16>
    %14 = arith.truncf %11 : vector<8x256xf32> to vector<8x256xbf16>
    %cst_11 = arith.constant dense<0.000000e+00> : vector<8x64xf32>
    %15 = tpu.matmul %14, %13, %cst_11 {dimension_numbers = #tpu.dot_dimension_numbers<[1], [0], [0], [1], [0, 0, 1, 1], [], []>} : vector<8x256xbf16>, vector<256x64xbf16>, vector<8x64xf32> -> vector<8x64xf32>
    %16 = arith.addf %2, %15 : vector<8x64xf32>
    %c0_12 = arith.constant 0 : index
    %c128 = arith.constant 128 : index
    %17 = vector.load %arg1[%c0_12, %c128] : memref<8x384xbf16, #tpu.memory_space<vmem>>, vector<8x128xbf16>
    %cst_13 = arith.constant dense<0.000000e+00> : vector<8x256xf32>
    %18 = tpu.matmul %17, %0, %cst_13 {dimension_numbers = #tpu.dot_dimension_numbers<[1], [0], [0], [1], [0, 0, 1, 1], [], []>} : vector<8x128xbf16>, vector<128x256xbf16>, vector<8x256xf32> -> vector<8x256xf32>
    %19 = vector.broadcast %1 : vector<1x256xf32> to vector<8x256xf32>
    %20 = arith.addf %18, %19 : vector<8x256xf32>
    %cst_14 = arith.constant 0.000000e+00 : f32
    %21 = vector.broadcast %cst_14 : f32 to vector<8x256xf32>
    %22 = arith.cmpf oge, %20, %21 : vector<8x256xf32>
    %cst_15 = arith.constant 0.00999999977 : f32
    %23 = vector.broadcast %cst_15 : f32 to vector<8x256xf32>
    %24 = arith.mulf %23, %20 : vector<8x256xf32>
    %25 = arith.select %22, %20, %24 : vector<8x256xi1>, vector<8x256xf32>
    %c1 = arith.constant 1 : index
    %c0_16 = arith.constant 0 : index
    %c0_17 = arith.constant 0 : index
    %26 = vector.load %arg4[%c1, %c0_16, %c0_17] : memref<3x256x64xbf16, #tpu.memory_space<vmem>>, vector<1x256x64xbf16>
    %27 = vector.shape_cast %26 : vector<1x256x64xbf16> to vector<256x64xbf16>
    %28 = arith.truncf %25 : vector<8x256xf32> to vector<8x256xbf16>
    %cst_18 = arith.constant dense<0.000000e+00> : vector<8x64xf32>
    %29 = tpu.matmul %28, %27, %cst_18 {dimension_numbers = #tpu.dot_dimension_numbers<[1], [0], [0], [1], [0, 0, 1, 1], [], []>} : vector<8x256xbf16>, vector<256x64xbf16>, vector<8x64xf32> -> vector<8x64xf32>
    %30 = arith.addf %16, %29 : vector<8x64xf32>
    %c0_19 = arith.constant 0 : index
    %c256 = arith.constant 256 : index
    %31 = vector.load %arg1[%c0_19, %c256] : memref<8x384xbf16, #tpu.memory_space<vmem>>, vector<8x128xbf16>
    %cst_20 = arith.constant dense<0.000000e+00> : vector<8x256xf32>
    %32 = tpu.matmul %31, %0, %cst_20 {dimension_numbers = #tpu.dot_dimension_numbers<[1], [0], [0], [1], [0, 0, 1, 1], [], []>} : vector<8x128xbf16>, vector<128x256xbf16>, vector<8x256xf32> -> vector<8x256xf32>
    %33 = vector.broadcast %1 : vector<1x256xf32> to vector<8x256xf32>
    %34 = arith.addf %32, %33 : vector<8x256xf32>
    %cst_21 = arith.constant 0.000000e+00 : f32
    %35 = vector.broadcast %cst_21 : f32 to vector<8x256xf32>
    %36 = arith.cmpf oge, %34, %35 : vector<8x256xf32>
    %cst_22 = arith.constant 0.00999999977 : f32
    %37 = vector.broadcast %cst_22 : f32 to vector<8x256xf32>
    %38 = arith.mulf %37, %34 : vector<8x256xf32>
    %39 = arith.select %36, %34, %38 : vector<8x256xi1>, vector<8x256xf32>
    %c2 = arith.constant 2 : index
    %c0_23 = arith.constant 0 : index
    %c0_24 = arith.constant 0 : index
    %40 = vector.load %arg4[%c2, %c0_23, %c0_24] : memref<3x256x64xbf16, #tpu.memory_space<vmem>>, vector<1x256x64xbf16>
    %41 = vector.shape_cast %40 : vector<1x256x64xbf16> to vector<256x64xbf16>
    %42 = arith.truncf %39 : vector<8x256xf32> to vector<8x256xbf16>
    %cst_25 = arith.constant dense<0.000000e+00> : vector<8x64xf32>
    %43 = tpu.matmul %42, %41, %cst_25 {dimension_numbers = #tpu.dot_dimension_numbers<[1], [0], [0], [1], [0, 0, 1, 1], [], []>} : vector<8x256xbf16>, vector<256x64xbf16>, vector<8x64xf32> -> vector<8x64xf32>
    %44 = arith.addf %30, %43 : vector<8x64xf32>
    %c0_26 = arith.constant 0 : index
    %c0_27 = arith.constant 0 : index
    %45 = vector.load %arg5[%c0_26, %c0_27] : memref<1x64xf32, #tpu.memory_space<vmem>>, vector<1x64xf32>
    %46 = vector.broadcast %45 : vector<1x64xf32> to vector<8x64xf32>
    %47 = arith.addf %44, %46 : vector<8x64xf32>
    %cst_28 = arith.constant 0.000000e+00 : f32
    %48 = vector.broadcast %cst_28 : f32 to vector<8x64xf32>
    %49 = arith.cmpf oge, %47, %48 : vector<8x64xf32>
    %cst_29 = arith.constant 0.00999999977 : f32
    %50 = vector.broadcast %cst_29 : f32 to vector<8x64xf32>
    %51 = arith.mulf %50, %47 : vector<8x64xf32>
    %52 = arith.select %49, %47, %51 : vector<8x64xi1>, vector<8x64xf32>
    %c0_30 = arith.constant 0 : index
    %c0_31 = arith.constant 0 : index
    %53 = vector.load %arg6[%c0_30, %c0_31] : memref<64x64xbf16, #tpu.memory_space<vmem>>, vector<64x64xbf16>
    %54 = arith.truncf %52 : vector<8x64xf32> to vector<8x64xbf16>
    %cst_32 = arith.constant dense<0.000000e+00> : vector<8x64xf32>
    %55 = tpu.matmul %54, %53, %cst_32 {dimension_numbers = #tpu.dot_dimension_numbers<[1], [0], [0], [1], [0, 0, 1, 1], [], []>} : vector<8x64xbf16>, vector<64x64xbf16>, vector<8x64xf32> -> vector<8x64xf32>
    %c0_33 = arith.constant 0 : index
    %c0_34 = arith.constant 0 : index
    %56 = vector.load %arg7[%c0_33, %c0_34] : memref<1x64xf32, #tpu.memory_space<vmem>>, vector<1x64xf32>
    %57 = vector.broadcast %56 : vector<1x64xf32> to vector<8x64xf32>
    %58 = arith.addf %55, %57 : vector<8x64xf32>
    %cst_35 = arith.constant 0.000000e+00 : f32
    %59 = vector.broadcast %cst_35 : f32 to vector<8x64xf32>
    %60 = arith.cmpf oge, %58, %59 : vector<8x64xf32>
    %cst_36 = arith.constant 0.00999999977 : f32
    %61 = vector.broadcast %cst_36 : f32 to vector<8x64xf32>
    %62 = arith.mulf %61, %58 : vector<8x64xf32>
    %63 = arith.select %60, %58, %62 : vector<8x64xi1>, vector<8x64xf32>
    %c0_37 = arith.constant 0 : index
    %c0_38 = arith.constant 0 : index
    %64 = vector.load %arg8[%c0_37, %c0_38] : memref<1x64xf32, #tpu.memory_space<vmem>>, vector<1x64xf32>
    %65 = vector.broadcast %64 : vector<1x64xf32> to vector<8x64xf32>
    %66 = arith.mulf %63, %65 : vector<8x64xf32>
    %cst_39 = arith.constant dense<0.000000e+00> : vector<8xf32>
    %67 = vector.multi_reduction <add>, %66, %cst_39 [1] : vector<8x64xf32> to vector<8xf32>
    %68 = vector.shape_cast %67 : vector<8xf32> to vector<8x1xf32>
    %c0_40 = arith.constant 0 : index
    %c0_41 = arith.constant 0 : index
    %69 = vector.load %arg9[%c0_40, %c0_41] : memref<1x1xf32, #tpu.memory_space<vmem>>, vector<1x1xf32>
    %70 = vector.broadcast %69 : vector<1x1xf32> to vector<8x1xf32>
    %71 = arith.addf %68, %70 : vector<8x1xf32>
    %72 = math.tanh %71 : vector<8x1xf32>
    %c0_42 = arith.constant 0 : index
    %c0_43 = arith.constant 0 : index
    %73 = vector.load %arg10[%c0_42, %c0_43] : memref<8x1xf32, #tpu.memory_space<vmem>>, vector<8x1xf32>
    tpu.vector_store %arg10[%c0_42, %c0_43], %72 {strides = array<i32>} : memref<8x1xf32, #tpu.memory_space<vmem>>, vector<8x1xf32>,
    return
  }
  func.func @transform_0(%arg0: i32) -> (i32, i32) {
    %c0_i32 = arith.constant 0 : i32
    %c0_i32_0 = arith.constant 0 : i32
    return %arg0, %c0_i32 : i32, i32
  }
  func.func @transform_1(%arg0: i32) -> (i32, i32) {
    %c0_i32 = arith.constant 0 : i32
    %c0_i32_0 = arith.constant 0 : i32
    %c0_i32_1 = arith.constant 0 : i32
    return %c0_i32, %c0_i32_0 : i32, i32
  }
  func.func @transform_2(%arg0: i32) -> (i32, i32) {
    %c0_i32 = arith.constant 0 : i32
    %c0_i32_0 = arith.constant 0 : i32
    %c0_i32_1 = arith.constant 0 : i32
    return %c0_i32, %c0_i32_0 : i32, i32
  }
  func.func @transform_3(%arg0: i32) -> (i32, i32, i32) {
    %c0_i32 = arith.constant 0 : i32
    %c0_i32_0 = arith.constant 0 : i32
    %c0_i32_1 = arith.constant 0 : i32
    %c0_i32_2 = arith.constant 0 : i32
    return %c0_i32, %c0_i32_0, %c0_i32_1 : i32, i32, i32
  }
  func.func @transform_4(%arg0: i32) -> (i32, i32) {
    %c0_i32 = arith.constant 0 : i32
    %c0_i32_0 = arith.constant 0 : i32
    %c0_i32_1 = arith.constant 0 : i32
    return %c0_i32, %c0_i32_0 : i32, i32
  }
  func.func @transform_5(%arg0: i32) -> (i32, i32) {
    %c0_i32 = arith.constant 0 : i32
    %c0_i32_0 = arith.constant 0 : i32
    %c0_i32_1 = arith.constant 0 : i32
    return %c0_i32, %c0_i32_0 : i32, i32
  }
  func.func @transform_6(%arg0: i32) -> (i32, i32) {
    %c0_i32 = arith.constant 0 : i32
    %c0_i32_0 = arith.constant 0 : i32
    %c0_i32_1 = arith.constant 0 : i32
    return %c0_i32, %c0_i32_0 : i32, i32
  }
  func.func @transform_7(%arg0: i32) -> (i32, i32) {
    %c0_i32 = arith.constant 0 : i32
    %c0_i32_0 = arith.constant 0 : i32
    %c0_i32_1 = arith.constant 0 : i32
    return %c0_i32, %c0_i32_0 : i32, i32
  }
  func.func @transform_8(%arg0: i32) -> (i32, i32) {
    %c0_i32 = arith.constant 0 : i32
    %c0_i32_0 = arith.constant 0 : i32
    %c0_i32_1 = arith.constant 0 : i32
    return %c0_i32, %c0_i32_0 : i32, i32
  }
  func.func @transform_9(%arg0: i32) -> (i32, i32) {
    %c0_i32 = arith.constant 0 : i32
    %c0_i32_0 = arith.constant 0 : i32
    return %arg0, %c0_i32 : i32, i32
  }
}

</mosaic_0001>

<llo_original>
// kernel: architecture1_forward.1
$region0: #{architecture1_forward.1}
  #allocation0 [shape = 'u32[]', space=smem, size = 0x4, offset = 0x4, fixed_abs, tag = 'smem constant byte address 0x4 - core index']
  #allocation1 [shape = 'u32[144,128]{1,0:T(1,128)}', space=vmem, size = 0x12000, scoped, tag = 'internal scratch']
  #allocation2 [shape = 'f32[1,1]{1,0:T(1,128)S(1)}', space=vmem, size = 0x200, scoped, tag = 'scoped memory for architecture1_forward.1']
  %s0 = inlined_call_operand.vmem [shape: bf16[8,384], index: 0, kind: input, shape index: {}]
  %s1 = inlined_call_operand.vmem [shape: bf16[128,256], index: 1, kind: input, shape index: {}]
  %s2 = inlined_call_operand.vmem [shape: f32[1,256], index: 2, kind: input, shape index: {}]
  %s3 = inlined_call_operand.vmem [shape: bf16[3,256,64], index: 3, kind: input, shape index: {}]
  %s4 = inlined_call_operand.vmem [shape: f32[1,64], index: 4, kind: input, shape index: {}]
  %s5 = inlined_call_operand.vmem [shape: bf16[64,64], index: 5, kind: input, shape index: {}]
  %s6 = inlined_call_operand.vmem [shape: f32[1,64], index: 6, kind: input, shape index: {}]
  %s7 = inlined_call_operand.vmem [shape: f32[1,64], index: 7, kind: input, shape index: {}]
  %s8 = inlined_call_operand.<no memory space> [shape: f32[1,1], index: 8, kind: input, shape index: {}]
  %s9 = inlined_call_operand.vmem [shape: f32[8,1], index: 9, kind: output, shape index: {}]
  %s10 = sld [smem:[#allocation0]]
  $region46: #{architecture1_forward.1} parent=0
    _
  %s12 = ssub.s32 1, %s10
  %s13 = scalar_select 0, %s12, %s10
  %v14 = vstv %s8
  %15 = vst [vmem:[#allocation2] sm:$0x1] %v14
  // Predicated region
  $region2: #{architecture1_forward.1} parent=0 // pred_check
    _
  $region3: #{architecture1_forward.1} parent=0 // pred_check_branch
    %17 = sbr.rel (0) target = $region5
  $region4: #{architecture1_forward.1} parent=0 // pred_region
    _
  $region5: #{architecture1_forward.1} parent=0 // pred_fallthru
    _
  // Predicated region
  $region6: #{architecture1_forward.1} parent=0 // pred_check
    _
  $region7: #{architecture1_forward.1} parent=0 // pred_check_branch
    %19 = sbr.rel (0) target = $region9
  $region8: #{architecture1_forward.1} parent=0 // pred_region
    _
  $region9: #{architecture1_forward.1} parent=0 // pred_fallthru
    _
  // Predicated region
  $region10: #{architecture1_forward.1} parent=0 // pred_check
    _
  $region11: #{architecture1_forward.1} parent=0 // pred_check_branch
    %21 = sbr.rel (0) target = $region13
  $region12: #{architecture1_forward.1} parent=0 // pred_region
    _
  $region13: #{architecture1_forward.1} parent=0 // pred_fallthru
    _
  // Predicated region
  $region14: #{architecture1_forward.1} parent=0 // pred_check
    _
  $region15: #{architecture1_forward.1} parent=0 // pred_check_branch
    %23 = sbr.rel (0) target = $region17
  $region16: #{architecture1_forward.1} parent=0 // pred_region
    _
  $region17: #{architecture1_forward.1} parent=0 // pred_fallthru
    _
  // Predicated region
  $region18: #{architecture1_forward.1} parent=0 // pred_check
    _
  $region19: #{architecture1_forward.1} parent=0 // pred_check_branch
    %25 = sbr.rel (0) target = $region21
  $region20: #{architecture1_forward.1} parent=0 // pred_region
    _
  $region21: #{architecture1_forward.1} parent=0 // pred_fallthru
    _
  // Predicated region
  $region22: #{architecture1_forward.1} parent=0 // pred_check
    _
  $region23: #{architecture1_forward.1} parent=0 // pred_check_branch
    %27 = sbr.rel (0) target = $region25
  $region24: #{architecture1_forward.1} parent=0 // pred_region
    _
  $region25: #{architecture1_forward.1} parent=0 // pred_fallthru
    _
  // Predicated region
  $region26: #{architecture1_forward.1} parent=0 // pred_check
    _
  $region27: #{architecture1_forward.1} parent=0 // pred_check_branch
    %29 = sbr.rel (0) target = $region29
  $region28: #{architecture1_forward.1} parent=0 // pred_region
    _
  $region29: #{architecture1_forward.1} parent=0 // pred_fallthru
    _
  // Predicated region
  $region30: #{architecture1_forward.1} parent=0 // pred_check
    _
  $region31: #{architecture1_forward.1} parent=0 // pred_check_branch
    %31 = sbr.rel (0) target = $region33
  $region32: #{architecture1_forward.1} parent=0 // pred_region
    _
  $region33: #{architecture1_forward.1} parent=0 // pred_fallthru
    _
  // Predicated region
  $region34: #{architecture1_forward.1} parent=0 // pred_check
    _
  $region35: #{architecture1_forward.1} parent=0 // pred_check_branch
    %33 = sbr.rel (0) target = $region37
  $region36: #{architecture1_forward.1} parent=0 // pred_region
    _
  $region37: #{architecture1_forward.1} parent=0 // pred_fallthru
    _
  %v35 = vld [vmem:[%s1] sm:$0xff]
  %v36 = vld [vmem:[%s1 + $0x8] sm:$0xff]
  %v37 = vld [vmem:[%s1 + $0x10] sm:$0xff]
  %v38 = vld [vmem:[%s1 + $0x18] sm:$0xff]
  %v39 = vld [vmem:[%s1 + $0x20] sm:$0xff]
  %v40 = vld [vmem:[%s1 + $0x28] sm:$0xff]
  %v41 = vld [vmem:[%s1 + $0x30] sm:$0xff]
  %v42 = vld [vmem:[%s1 + $0x38] sm:$0xff]
  %v43 = vld [vmem:[%s1 + $0x40] sm:$0xff]
  %v44 = vld [vmem:[%s1 + $0x48] sm:$0xff]
  %v45 = vld [vmem:[%s1 + $0x50] sm:$0xff]
  %v46 = vld [vmem:[%s1 + $0x58] sm:$0xff]
  %v47 = vld [vmem:[%s1 + $0x60] sm:$0xff]
  %v48 = vld [vmem:[%s1 + $0x68] sm:$0xff]
  %v49 = vld [vmem:[%s1 + $0x70] sm:$0xff]
  %v50 = vld [vmem:[%s1 + $0x78] sm:$0xff]
  %v51 = vld [vmem:[%s2] sm:$0x3]
  %v52 = vld [vmem:[%s0] sm:$0xf]
  %v54 = vlaneseq
  %v55 = vshrl.u32 %v54, 7
  %v56 = vsub.s32 0, %v55
  %v57 = vrot.slane %v51, %v56
  %v58 = vlaneseq
  %v59 = vshrl.u32 %v58, 7
  %v60 = vsub.s32 1, %v59
  %v61 = vrot.slane %v51, %v60
  %v80 = vunpack.c.l.b16 %v35
  %v81 = vunpack.c.h.b16 %v35
  %v82 = vunpack.c.l.b16 %v36
  %v83 = vunpack.c.h.b16 %v36
  %v84 = vunpack.c.l.b16 %v37
  %v85 = vunpack.c.h.b16 %v37
  %v86 = vunpack.c.l.b16 %v38
  %v87 = vunpack.c.h.b16 %v38
  %v88 = vunpack.c.l.b16 %v39
  %v89 = vunpack.c.h.b16 %v39
  %v90 = vunpack.c.l.b16 %v40
  %v91 = vunpack.c.h.b16 %v40
  %v92 = vunpack.c.l.b16 %v41
  %v93 = vunpack.c.h.b16 %v41
  %v94 = vunpack.c.l.b16 %v42
  %v95 = vunpack.c.h.b16 %v42
  %v96 = vunpack.c.l.b16 %v43
  %v97 = vunpack.c.h.b16 %v43
  %v98 = vunpack.c.l.b16 %v44
  %v99 = vunpack.c.h.b16 %v44
  %v100 = vunpack.c.l.b16 %v45
  %v101 = vunpack.c.h.b16 %v45
  %v102 = vunpack.c.l.b16 %v46
  %v103 = vunpack.c.h.b16 %v46
  %v104 = vunpack.c.l.b16 %v47
  %v105 = vunpack.c.h.b16 %v47
  %v106 = vunpack.c.l.b16 %v48
  %v107 = vunpack.c.h.b16 %v48
  %v108 = vunpack.c.l.b16 %v49
  %v109 = vunpack.c.h.b16 %v49
  %v110 = vunpack.c.l.b16 %v50
  %v111 = vunpack.c.h.b16 %v50
  %v112 = vpack.c.b16 %v82, %v80
  %v113 = vpack.c.b16 %v83, %v81
  %v114 = vpack.c.b16 %v86, %v84
  %v115 = vpack.c.b16 %v87, %v85
  %v116 = vpack.c.b16 %v90, %v88
  %v117 = vpack.c.b16 %v91, %v89
  %v118 = vpack.c.b16 %v94, %v92
  %v119 = vpack.c.b16 %v95, %v93
  %v120 = vpack.c.b16 %v98, %v96
  %v121 = vpack.c.b16 %v99, %v97
  %v122 = vpack.c.b16 %v102, %v100
  %v123 = vpack.c.b16 %v103, %v101
  %v124 = vpack.c.b16 %v106, %v104
  %v125 = vpack.c.b16 %v107, %v105
  %v126 = vpack.c.b16 %v110, %v108
  %v127 = vpack.c.b16 %v111, %v109
  %144 = vmatprep.subr.bf16.mxu0 %v113
  %145 = vmatpush1.bf16.msra.mxu0 %v112
  %146 = vmatprep.subr.bf16.mxu0 %v115
  %147 = vmatpush1.bf16.msra.mxu0 %v114
  %148 = vmatprep.subr.bf16.mxu0 %v117
  %149 = vmatpush1.bf16.msra.mxu0 %v116
  %150 = vmatprep.subr.bf16.mxu0 %v119
  %151 = vmatpush1.bf16.msra.mxu0 %v118
  %152 = vmatprep.subr.bf16.mxu0 %v121
  %153 = vmatpush1.bf16.msra.mxu0 %v120
  %154 = vmatprep.subr.bf16.mxu0 %v123
  %155 = vmatpush1.bf16.msra.mxu0 %v122
  %156 = vmatprep.subr.bf16.mxu0 %v125
  %157 = vmatpush1.bf16.msra.mxu0 %v124
  %158 = vmatprep.subr.bf16.mxu0 %v127
  %159 = vmatpush1.bf16.msra.mxu0 %v126
  %160 = vmatprep.subr.bf16.mxu0 0
  %161 = vmatpush1.bf16.msra.mxu0 0
  %162 = vmatprep.subr.bf16.mxu0 0
  %163 = vmatpush1.bf16.msra.mxu0 0
  %164 = vmatprep.subr.bf16.mxu0 0
  %165 = vmatpush1.bf16.msra.mxu0 0
  %166 = vmatprep.subr.bf16.mxu0 0
  %167 = vmatpush1.bf16.msra.mxu0 0
  %168 = vmatprep.subr.bf16.mxu0 0
  %169 = vmatpush1.bf16.msra.mxu0 0
  %170 = vmatprep.subr.bf16.mxu0 0
  %171 = vmatpush1.bf16.msra.mxu0 0
  %172 = vmatprep.subr.bf16.mxu0 0
  %173 = vmatpush1.bf16.msra.mxu0 0
  %174 = vmatprep.subr.bf16.mxu0 0
  %175 = vmatpush1.bf16.msra.mxu0 0
  %176 = vmatprep.mubr.bf16.mxu0 0
  %177 = vmatmul.mubr.bf16.gmra.mrb[0].mxu0 %v52
  %v178 = vpop.f32.mrb[0].mxu0
  %v179 = vadd.f32 %v57, %v178
  %v180 = vpop.f32.mrb[0].mxu0
  %v181 = vadd.f32 %v61, %v180
  %v182 = vpop.f32.mrb[0].mxu0
  %v183 = vpop.f32.mrb[0].mxu0
  %184 = vdwg.mxu0
  %vm185 = vcmp.ge.f32.partialorder %v179, 0.0
  %vm186 = vcmp.ge.f32.partialorder %v181, 0.0
  %v187 = vmul.f32 %v179, 0.01
  %v188 = vmul.f32 %v181, 0.01
  %v189 = vsel %vm185, %v179, %v187
  %v190 = vsel %vm186, %v181, %v188
  %v191 = vld [vmem:[%s3] sm:$0xf]
  %v192 = vld [vmem:[%s3 + $0x4] sm:$0xf]
  %v193 = vld [vmem:[%s3 + $0x8] sm:$0xf]
  %v194 = vld [vmem:[%s3 + $0xc] sm:$0xf]
  %v195 = vld [vmem:[%s3 + $0x10] sm:$0xf]
  %v196 = vld [vmem:[%s3 + $0x14] sm:$0xf]
  %v197 = vld [vmem:[%s3 + $0x18] sm:$0xf]
  %v198 = vld [vmem:[%s3 + $0x1c] sm:$0xf]
  %v199 = vld [vmem:[%s3 + $0x20] sm:$0xf]
  %v200 = vld [vmem:[%s3 + $0x24] sm:$0xf]
  %v201 = vld [vmem:[%s3 + $0x28] sm:$0xf]
  %v202 = vld [vmem:[%s3 + $0x2c] sm:$0xf]
  %v203 = vld [vmem:[%s3 + $0x30] sm:$0xf]
  %v204 = vld [vmem:[%s3 + $0x34] sm:$0xf]
  %v205 = vld [vmem:[%s3 + $0x38] sm:$0xf]
  %v206 = vld [vmem:[%s3 + $0x3c] sm:$0xf]
  %v207 = vld [vmem:[%s3 + $0x40] sm:$0xf]
  %v208 = vld [vmem:[%s3 + $0x44] sm:$0xf]
  %v209 = vld [vmem:[%s3 + $0x48] sm:$0xf]
  %v210 = vld [vmem:[%s3 + $0x4c] sm:$0xf]
  %v211 = vld [vmem:[%s3 + $0x50] sm:$0xf]
  %v212 = vld [vmem:[%s3 + $0x54] sm:$0xf]
  %v213 = vld [vmem:[%s3 + $0x58] sm:$0xf]
  %v214 = vld [vmem:[%s3 + $0x5c] sm:$0xf]
  %v215 = vld [vmem:[%s3 + $0x60] sm:$0xf]
  %v216 = vld [vmem:[%s3 + $0x64] sm:$0xf]
  %v217 = vld [vmem:[%s3 + $0x68] sm:$0xf]
  %v218 = vld [vmem:[%s3 + $0x6c] sm:$0xf]
  %v219 = vld [vmem:[%s3 + $0x70] sm:$0xf]
  %v220 = vld [vmem:[%s3 + $0x74] sm:$0xf]
  %v221 = vld [vmem:[%s3 + $0x78] sm:$0xf]
  %v222 = vld [vmem:[%s3 + $0x7c] sm:$0xf]
  %v223 = vpack.c.bf16 %v189, %v189
  %v224 = vpack.c.bf16 %v190, %v190
  %v225 = vld [vmem:[%s0 + $0x4] sm:$0xf]
  %226 = vmatprep.subr.bf16.mxu0 %v113
  %227 = vmatpush1.bf16.msra.mxu0 %v112
  %228 = vmatprep.subr.bf16.mxu0 %v115
  %229 = vmatpush1.bf16.msra.mxu0 %v114
  %230 = vmatprep.subr.bf16.mxu0 %v117
  %231 = vmatpush1.bf16.msra.mxu0 %v116
  %232 = vmatprep.subr.bf16.mxu0 %v119
  %233 = vmatpush1.bf16.msra.mxu0 %v118
  %234 = vmatprep.subr.bf16.mxu0 %v121
  %235 = vmatpush1.bf16.msra.mxu0 %v120
  %236 = vmatprep.subr.bf16.mxu0 %v123
  %237 = vmatpush1.bf16.msra.mxu0 %v122
  %238 = vmatprep.subr.bf16.mxu0 %v125
  %239 = vmatpush1.bf16.msra.mxu0 %v124
  %240 = vmatprep.subr.bf16.mxu0 %v127
  %241 = vmatpush1.bf16.msra.mxu0 %v126
  %242 = vmatprep.subr.bf16.mxu0 0
  %243 = vmatpush1.bf16.msra.mxu0 0
  %244 = vmatprep.subr.bf16.mxu0 0
  %245 = vmatpush1.bf16.msra.mxu0 0
  %246 = vmatprep.subr.bf16.mxu0 0
  %247 = vmatpush1.bf16.msra.mxu0 0
  %248 = vmatprep.subr.bf16.mxu0 0
  %249 = vmatpush1.bf16.msra.mxu0 0
  %250 = vmatprep.subr.bf16.mxu0 0
  %251 = vmatpush1.bf16.msra.mxu0 0
  %252 = vmatprep.subr.bf16.mxu0 0
  %253 = vmatpush1.bf16.msra.mxu0 0
  %254 = vmatprep.subr.bf16.mxu0 0
  %255 = vmatpush1.bf16.msra.mxu0 0
  %256 = vmatprep.subr.bf16.mxu0 0
  %257 = vmatpush1.bf16.msra.mxu0 0
  %258 = vmatprep.mubr.bf16.mxu0 0
  %259 = vmatmul.mubr.bf16.gmra.mrb[0].mxu0 %v225
  %v260 = vpop.f32.mrb[0].mxu0
  %v261 = vadd.f32 %v57, %v260
  %v262 = vpop.f32.mrb[0].mxu0
  %v263 = vadd.f32 %v61, %v262
  %v264 = vpop.f32.mrb[0].mxu0
  %v265 = vpop.f32.mrb[0].mxu0
  %266 = vdwg.mxu0
  %vm267 = vcmp.ge.f32.partialorder %v261, 0.0
  %vm268 = vcmp.ge.f32.partialorder %v263, 0.0
  %v269 = vmul.f32 %v261, 0.01
  %v270 = vmul.f32 %v263, 0.01
  %v271 = vsel %vm267, %v261, %v269
  %v272 = vsel %vm268, %v263, %v270
  %s273 = scalar_lea.vmem %s3, 128
  %v274 = vld [vmem:[%s273] sm:$0xf]
  %v275 = vld [vmem:[%s273 + $0x4] sm:$0xf]
  %v276 = vld [vmem:[%s273 + $0x8] sm:$0xf]
  %v277 = vld [vmem:[%s273 + $0xc] sm:$0xf]
  %v278 = vld [vmem:[%s273 + $0x10] sm:$0xf]
  %v279 = vld [vmem:[%s273 + $0x14] sm:$0xf]
  %v280 = vld [vmem:[%s273 + $0x18] sm:$0xf]
  %v281 = vld [vmem:[%s273 + $0x1c] sm:$0xf]
  %v282 = vld [vmem:[%s273 + $0x20] sm:$0xf]
  %v283 = vld [vmem:[%s273 + $0x24] sm:$0xf]
  %v284 = vld [vmem:[%s273 + $0x28] sm:$0xf]
  %v285 = vld [vmem:[%s273 + $0x2c] sm:$0xf]
  %v286 = vld [vmem:[%s273 + $0x30] sm:$0xf]
  %v287 = vld [vmem:[%s273 + $0x34] sm:$0xf]
  %v288 = vld [vmem:[%s273 + $0x38] sm:$0xf]
  %v289 = vld [vmem:[%s273 + $0x3c] sm:$0xf]
  %v290 = vld [vmem:[%s273 + $0x40] sm:$0xf]
  %v291 = vld [vmem:[%s273 + $0x44] sm:$0xf]
  %v292 = vld [vmem:[%s273 + $0x48] sm:$0xf]
  %v293 = vld [vmem:[%s273 + $0x4c] sm:$0xf]
  %v294 = vld [vmem:[%s273 + $0x50] sm:$0xf]
  %v295 = vld [vmem:[%s273 + $0x54] sm:$0xf]
  %v296 = vld [vmem:[%s273 + $0x58] sm:$0xf]
  %v297 = vld [vmem:[%s273 + $0x5c] sm:$0xf]
  %v298 = vld [vmem:[%s273 + $0x60] sm:$0xf]
  %v299 = vld [vmem:[%s273 + $0x64] sm:$0xf]
  %v300 = vld [vmem:[%s273 + $0x68] sm:$0xf]
  %v301 = vld [vmem:[%s273 + $0x6c] sm:$0xf]
  %v302 = vld [vmem:[%s273 + $0x70] sm:$0xf]
  %v303 = vld [vmem:[%s273 + $0x74] sm:$0xf]
  %v304 = vld [vmem:[%s273 + $0x78] sm:$0xf]
  %v305 = vld [vmem:[%s273 + $0x7c] sm:$0xf]
  %v306 = vpack.c.bf16 %v271, %v271
  %v307 = vpack.c.bf16 %v272, %v272
  %v340 = vunpack.c.l.b16 %v274
  %v341 = vunpack.c.l.b16 %v275
  %v342 = vunpack.c.l.b16 %v276
  %v343 = vunpack.c.l.b16 %v277
  %v344 = vunpack.c.l.b16 %v278
  %v345 = vunpack.c.l.b16 %v279
  %v346 = vunpack.c.l.b16 %v280
  %v347 = vunpack.c.l.b16 %v281
  %v348 = vunpack.c.l.b16 %v282
  %v349 = vunpack.c.l.b16 %v283
  %v350 = vunpack.c.l.b16 %v284
  %v351 = vunpack.c.l.b16 %v285
  %v352 = vunpack.c.l.b16 %v286
  %v353 = vunpack.c.l.b16 %v287
  %v354 = vunpack.c.l.b16 %v288
  %v355 = vunpack.c.l.b16 %v289
  %v356 = vunpack.c.l.b16 %v290
  %v357 = vunpack.c.l.b16 %v291
  %v358 = vunpack.c.l.b16 %v292
  %v359 = vunpack.c.l.b16 %v293
  %v360 = vunpack.c.l.b16 %v294
  %v361 = vunpack.c.l.b16 %v295
  %v362 = vunpack.c.l.b16 %v296
  %v363 = vunpack.c.l.b16 %v297
  %v364 = vunpack.c.l.b16 %v298
  %v365 = vunpack.c.l.b16 %v299
  %v366 = vunpack.c.l.b16 %v300
  %v367 = vunpack.c.l.b16 %v301
  %v368 = vunpack.c.l.b16 %v302
  %v369 = vunpack.c.l.b16 %v303
  %v370 = vunpack.c.l.b16 %v304
  %v371 = vunpack.c.l.b16 %v305
  %v372 = vpack.c.b16 %v341, %v340
  %v373 = vpack.c.b16 %v343, %v342
  %v374 = vpack.c.b16 %v345, %v344
  %v375 = vpack.c.b16 %v347, %v346
  %v376 = vpack.c.b16 %v349, %v348
  %v377 = vpack.c.b16 %v351, %v350
  %v378 = vpack.c.b16 %v353, %v352
  %v379 = vpack.c.b16 %v355, %v354
  %v380 = vpack.c.b16 %v357, %v356
  %v381 = vpack.c.b16 %v359, %v358
  %v382 = vpack.c.b16 %v361, %v360
  %v383 = vpack.c.b16 %v363, %v362
  %v384 = vpack.c.b16 %v365, %v364
  %v385 = vpack.c.b16 %v367, %v366
  %v386 = vpack.c.b16 %v369, %v368
  %v387 = vpack.c.b16 %v371, %v370
  %404 = vmatprep.subr.bf16.mxu0 0
  %405 = vmatpush1.bf16.msra.mxu0 %v372
  %406 = vmatprep.subr.bf16.mxu0 0
  %407 = vmatpush1.bf16.msra.mxu0 %v373
  %408 = vmatprep.subr.bf16.mxu0 0
  %409 = vmatpush1.bf16.msra.mxu0 %v374
  %410 = vmatprep.subr.bf16.mxu0 0
  %411 = vmatpush1.bf16.msra.mxu0 %v375
  %412 = vmatprep.subr.bf16.mxu0 0
  %413 = vmatpush1.bf16.msra.mxu0 %v376
  %414 = vmatprep.subr.bf16.mxu0 0
  %415 = vmatpush1.bf16.msra.mxu0 %v377
  %416 = vmatprep.subr.bf16.mxu0 0
  %417 = vmatpush1.bf16.msra.mxu0 %v378
  %418 = vmatprep.subr.bf16.mxu0 0
  %419 = vmatpush1.bf16.msra.mxu0 %v379
  %420 = vmatprep.subr.bf16.mxu0 0
  %421 = vmatpush1.bf16.msra.mxu0 %v380
  %422 = vmatprep.subr.bf16.mxu0 0
  %423 = vmatpush1.bf16.msra.mxu0 %v381
  %424 = vmatprep.subr.bf16.mxu0 0
  %425 = vmatpush1.bf16.msra.mxu0 %v382
  %426 = vmatprep.subr.bf16.mxu0 0
  %427 = vmatpush1.bf16.msra.mxu0 %v383
  %428 = vmatprep.subr.bf16.mxu0 0
  %429 = vmatpush1.bf16.msra.mxu0 %v384
  %430 = vmatprep.subr.bf16.mxu0 0
  %431 = vmatpush1.bf16.msra.mxu0 %v385
  %432 = vmatprep.subr.bf16.mxu0 0
  %433 = vmatpush1.bf16.msra.mxu0 %v386
  %434 = vmatprep.subr.bf16.mxu0 0
  %435 = vmatpush1.bf16.msra.mxu0 %v387
  %436 = vmatprep.mubr.bf16.mxu0 %v307
  %437 = vmatmul.mubr.bf16.gmra.mrb[0].mxu0 %v306
  %v438 = vpop.f32.mrb[0].mxu0
  %v439 = vadd.f32 0.0, %v438
  %v440 = vpop.f32.mrb[0].mxu0
  %v441 = vpop.f32.mrb[0].mxu0
  %v442 = vpop.f32.mrb[0].mxu0
  %443 = vdwg.mxu0
  %v476 = vunpack.c.l.b16 %v191
  %v477 = vunpack.c.l.b16 %v192
  %v478 = vunpack.c.l.b16 %v193
  %v479 = vunpack.c.l.b16 %v194
  %v480 = vunpack.c.l.b16 %v195
  %v481 = vunpack.c.l.b16 %v196
  %v482 = vunpack.c.l.b16 %v197
  %v483 = vunpack.c.l.b16 %v198
  %v484 = vunpack.c.l.b16 %v199
  %v485 = vunpack.c.l.b16 %v200
  %v486 = vunpack.c.l.b16 %v201
  %v487 = vunpack.c.l.b16 %v202
  %v488 = vunpack.c.l.b16 %v203
  %v489 = vunpack.c.l.b16 %v204
  %v490 = vunpack.c.l.b16 %v205
  %v491 = vunpack.c.l.b16 %v206
  %v492 = vunpack.c.l.b16 %v207
  %v493 = vunpack.c.l.b16 %v208
  %v494 = vunpack.c.l.b16 %v209
  %v495 = vunpack.c.l.b16 %v210
  %v496 = vunpack.c.l.b16 %v211
  %v497 = vunpack.c.l.b16 %v212
  %v498 = vunpack.c.l.b16 %v213
  %v499 = vunpack.c.l.b16 %v214
  %v500 = vunpack.c.l.b16 %v215
  %v501 = vunpack.c.l.b16 %v216
  %v502 = vunpack.c.l.b16 %v217
  %v503 = vunpack.c.l.b16 %v218
  %v504 = vunpack.c.l.b16 %v219
  %v505 = vunpack.c.l.b16 %v220
  %v506 = vunpack.c.l.b16 %v221
  %v507 = vunpack.c.l.b16 %v222
  %v508 = vpack.c.b16 %v477, %v476
  %v509 = vpack.c.b16 %v479, %v478
  %v510 = vpack.c.b16 %v481, %v480
  %v511 = vpack.c.b16 %v483, %v482
  %v512 = vpack.c.b16 %v485, %v484
  %v513 = vpack.c.b16 %v487, %v486
  %v514 = vpack.c.b16 %v489, %v488
  %v515 = vpack.c.b16 %v491, %v490
  %v516 = vpack.c.b16 %v493, %v492
  %v517 = vpack.c.b16 %v495, %v494
  %v518 = vpack.c.b16 %v497, %v496
  %v519 = vpack.c.b16 %v499, %v498
  %v520 = vpack.c.b16 %v501, %v500
  %v521 = vpack.c.b16 %v503, %v502
  %v522 = vpack.c.b16 %v505, %v504
  %v523 = vpack.c.b16 %v507, %v506
  %540 = vmatprep.subr.bf16.mxu0 0
  %541 = vmatpush1.bf16.msra.mxu0 %v508
  %542 = vmatprep.subr.bf16.mxu0 0
  %543 = vmatpush1.bf16.msra.mxu0 %v509
  %544 = vmatprep.subr.bf16.mxu0 0
  %545 = vmatpush1.bf16.msra.mxu0 %v510
  %546 = vmatprep.subr.bf16.mxu0 0
  %547 = vmatpush1.bf16.msra.mxu0 %v511
  %548 = vmatprep.subr.bf16.mxu0 0
  %549 = vmatpush1.bf16.msra.mxu0 %v512
  %550 = vmatprep.subr.bf16.mxu0 0
  %551 = vmatpush1.bf16.msra.mxu0 %v513
  %552 = vmatprep.subr.bf16.mxu0 0
  %553 = vmatpush1.bf16.msra.mxu0 %v514
  %554 = vmatprep.subr.bf16.mxu0 0
  %555 = vmatpush1.bf16.msra.mxu0 %v515
  %556 = vmatprep.subr.bf16.mxu0 0
  %557 = vmatpush1.bf16.msra.mxu0 %v516
  %558 = vmatprep.subr.bf16.mxu0 0
  %559 = vmatpush1.bf16.msra.mxu0 %v517
  %560 = vmatprep.subr.bf16.mxu0 0
  %561 = vmatpush1.bf16.msra.mxu0 %v518
  %562 = vmatprep.subr.bf16.mxu0 0
  %563 = vmatpush1.bf16.msra.mxu0 %v519
  %564 = vmatprep.subr.bf16.mxu0 0
  %565 = vmatpush1.bf16.msra.mxu0 %v520
  %566 = vmatprep.subr.bf16.mxu0 0
  %567 = vmatpush1.bf16.msra.mxu0 %v521
  %568 = vmatprep.subr.bf16.mxu0 0
  %569 = vmatpush1.bf16.msra.mxu0 %v522
  %570 = vmatprep.subr.bf16.mxu0 0
  %571 = vmatpush1.bf16.msra.mxu0 %v523
  %572 = vmatprep.mubr.bf16.mxu0 %v224
  %573 = vmatmul.mubr.bf16.gmra.mrb[0].mxu0 %v223
  %v574 = vpop.f32.mrb[0].mxu0
  %v575 = vadd.f32 %v439, %v574
  %v576 = vpop.f32.mrb[0].mxu0
  %v577 = vpop.f32.mrb[0].mxu0
  %v578 = vpop.f32.mrb[0].mxu0
  %579 = vdwg.mxu0
  %v580 = vld [vmem:[%s0 + $0x8] sm:$0xf]
  %581 = vmatprep.subr.bf16.mxu0 %v113
  %582 = vmatpush1.bf16.msra.mxu0 %v112
  %583 = vmatprep.subr.bf16.mxu0 %v115
  %584 = vmatpush1.bf16.msra.mxu0 %v114
  %585 = vmatprep.subr.bf16.mxu0 %v117
  %586 = vmatpush1.bf16.msra.mxu0 %v116
  %587 = vmatprep.subr.bf16.mxu0 %v119
  %588 = vmatpush1.bf16.msra.mxu0 %v118
  %589 = vmatprep.subr.bf16.mxu0 %v121
  %590 = vmatpush1.bf16.msra.mxu0 %v120
  %591 = vmatprep.subr.bf16.mxu0 %v123
  %592 = vmatpush1.bf16.msra.mxu0 %v122
  %593 = vmatprep.subr.bf16.mxu0 %v125
  %594 = vmatpush1.bf16.msra.mxu0 %v124
  %595 = vmatprep.subr.bf16.mxu0 %v127
  %596 = vmatpush1.bf16.msra.mxu0 %v126
  %597 = vmatprep.subr.bf16.mxu0 0
  %598 = vmatpush1.bf16.msra.mxu0 0
  %599 = vmatprep.subr.bf16.mxu0 0
  %600 = vmatpush1.bf16.msra.mxu0 0
  %601 = vmatprep.subr.bf16.mxu0 0
  %602 = vmatpush1.bf16.msra.mxu0 0
  %603 = vmatprep.subr.bf16.mxu0 0
  %604 = vmatpush1.bf16.msra.mxu0 0
  %605 = vmatprep.subr.bf16.mxu0 0
  %606 = vmatpush1.bf16.msra.mxu0 0
  %607 = vmatprep.subr.bf16.mxu0 0
  %608 = vmatpush1.bf16.msra.mxu0 0
  %609 = vmatprep.subr.bf16.mxu0 0
  %610 = vmatpush1.bf16.msra.mxu0 0
  %611 = vmatprep.subr.bf16.mxu0 0
  %612 = vmatpush1.bf16.msra.mxu0 0
  %613 = vmatprep.mubr.bf16.mxu0 0
  %614 = vmatmul.mubr.bf16.gmra.mrb[0].mxu0 %v580
  %v615 = vpop.f32.mrb[0].mxu0
  %v616 = vadd.f32 %v57, %v615
  %v617 = vpop.f32.mrb[0].mxu0
  %v618 = vadd.f32 %v61, %v617
  %v619 = vpop.f32.mrb[0].mxu0
  %v620 = vpop.f32.mrb[0].mxu0
  %621 = vdwg.mxu0
  %vm622 = vcmp.ge.f32.partialorder %v616, 0.0
  %vm623 = vcmp.ge.f32.partialorder %v618, 0.0
  %v624 = vmul.f32 %v616, 0.01
  %v625 = vmul.f32 %v618, 0.01
  %v626 = vsel %vm622, %v616, %v624
  %v627 = vsel %vm623, %v618, %v625
  %s628 = scalar_lea.vmem %s3, 256
  %v629 = vld [vmem:[%s628] sm:$0xf]
  %v630 = vld [vmem:[%s628 + $0x4] sm:$0xf]
  %v631 = vld [vmem:[%s628 + $0x8] sm:$0xf]
  %v632 = vld [vmem:[%s628 + $0xc] sm:$0xf]
  %v633 = vld [vmem:[%s628 + $0x10] sm:$0xf]
  %v634 = vld [vmem:[%s628 + $0x14] sm:$0xf]
  %v635 = vld [vmem:[%s628 + $0x18] sm:$0xf]
  %v636 = vld [vmem:[%s628 + $0x1c] sm:$0xf]
  %v637 = vld [vmem:[%s628 + $0x20] sm:$0xf]
  %v638 = vld [vmem:[%s628 + $0x24] sm:$0xf]
  %v639 = vld [vmem:[%s628 + $0x28] sm:$0xf]
  %v640 = vld [vmem:[%s628 + $0x2c] sm:$0xf]
  %v641 = vld [vmem:[%s628 + $0x30] sm:$0xf]
  %v642 = vld [vmem:[%s628 + $0x34] sm:$0xf]
  %v643 = vld [vmem:[%s628 + $0x38] sm:$0xf]
  %v644 = vld [vmem:[%s628 + $0x3c] sm:$0xf]
  %v645 = vld [vmem:[%s628 + $0x40] sm:$0xf]
  %v646 = vld [vmem:[%s628 + $0x44] sm:$0xf]
  %v647 = vld [vmem:[%s628 + $0x48] sm:$0xf]
  %v648 = vld [vmem:[%s628 + $0x4c] sm:$0xf]
  %v649 = vld [vmem:[%s628 + $0x50] sm:$0xf]
  %v650 = vld [vmem:[%s628 + $0x54] sm:$0xf]
  %v651 = vld [vmem:[%s628 + $0x58] sm:$0xf]
  %v652 = vld [vmem:[%s628 + $0x5c] sm:$0xf]
  %v653 = vld [vmem:[%s628 + $0x60] sm:$0xf]
  %v654 = vld [vmem:[%s628 + $0x64] sm:$0xf]
  %v655 = vld [vmem:[%s628 + $0x68] sm:$0xf]
  %v656 = vld [vmem:[%s628 + $0x6c] sm:$0xf]
  %v657 = vld [vmem:[%s628 + $0x70] sm:$0xf]
  %v658 = vld [vmem:[%s628 + $0x74] sm:$0xf]
  %v659 = vld [vmem:[%s628 + $0x78] sm:$0xf]
  %v660 = vld [vmem:[%s628 + $0x7c] sm:$0xf]
  %v661 = vpack.c.bf16 %v626, %v626
  %v662 = vpack.c.bf16 %v627, %v627
  %v695 = vunpack.c.l.b16 %v629
  %v696 = vunpack.c.l.b16 %v630
  %v697 = vunpack.c.l.b16 %v631
  %v698 = vunpack.c.l.b16 %v632
  %v699 = vunpack.c.l.b16 %v633
  %v700 = vunpack.c.l.b16 %v634
  %v701 = vunpack.c.l.b16 %v635
  %v702 = vunpack.c.l.b16 %v636
  %v703 = vunpack.c.l.b16 %v637
  %v704 = vunpack.c.l.b16 %v638
  %v705 = vunpack.c.l.b16 %v639
  %v706 = vunpack.c.l.b16 %v640
  %v707 = vunpack.c.l.b16 %v641
  %v708 = vunpack.c.l.b16 %v642
  %v709 = vunpack.c.l.b16 %v643
  %v710 = vunpack.c.l.b16 %v644
  %v711 = vunpack.c.l.b16 %v645
  %v712 = vunpack.c.l.b16 %v646
  %v713 = vunpack.c.l.b16 %v647
  %v714 = vunpack.c.l.b16 %v648
  %v715 = vunpack.c.l.b16 %v649
  %v716 = vunpack.c.l.b16 %v650
  %v717 = vunpack.c.l.b16 %v651
  %v718 = vunpack.c.l.b16 %v652
  %v719 = vunpack.c.l.b16 %v653
  %v720 = vunpack.c.l.b16 %v654
  %v721 = vunpack.c.l.b16 %v655
  %v722 = vunpack.c.l.b16 %v656
  %v723 = vunpack.c.l.b16 %v657
  %v724 = vunpack.c.l.b16 %v658
  %v725 = vunpack.c.l.b16 %v659
  %v726 = vunpack.c.l.b16 %v660
  %v727 = vpack.c.b16 %v696, %v695
  %v728 = vpack.c.b16 %v698, %v697
  %v729 = vpack.c.b16 %v700, %v699
  %v730 = vpack.c.b16 %v702, %v701
  %v731 = vpack.c.b16 %v704, %v703
  %v732 = vpack.c.b16 %v706, %v705
  %v733 = vpack.c.b16 %v708, %v707
  %v734 = vpack.c.b16 %v710, %v709
  %v735 = vpack.c.b16 %v712, %v711
  %v736 = vpack.c.b16 %v714, %v713
  %v737 = vpack.c.b16 %v716, %v715
  %v738 = vpack.c.b16 %v718, %v717
  %v739 = vpack.c.b16 %v720, %v719
  %v740 = vpack.c.b16 %v722, %v721
  %v741 = vpack.c.b16 %v724, %v723
  %v742 = vpack.c.b16 %v726, %v725
  %759 = vmatprep.subr.bf16.mxu0 0
  %760 = vmatpush1.bf16.msra.mxu0 %v727
  %761 = vmatprep.subr.bf16.mxu0 0
  %762 = vmatpush1.bf16.msra.mxu0 %v728
  %763 = vmatprep.subr.bf16.mxu0 0
  %764 = vmatpush1.bf16.msra.mxu0 %v729
  %765 = vmatprep.subr.bf16.mxu0 0
  %766 = vmatpush1.bf16.msra.mxu0 %v730
  %767 = vmatprep.subr.bf16.mxu0 0
  %768 = vmatpush1.bf16.msra.mxu0 %v731
  %769 = vmatprep.subr.bf16.mxu0 0
  %770 = vmatpush1.bf16.msra.mxu0 %v732
  %771 = vmatprep.subr.bf16.mxu0 0
  %772 = vmatpush1.bf16.msra.mxu0 %v733
  %773 = vmatprep.subr.bf16.mxu0 0
  %774 = vmatpush1.bf16.msra.mxu0 %v734
  %775 = vmatprep.subr.bf16.mxu0 0
  %776 = vmatpush1.bf16.msra.mxu0 %v735
  %777 = vmatprep.subr.bf16.mxu0 0
  %778 = vmatpush1.bf16.msra.mxu0 %v736
  %779 = vmatprep.subr.bf16.mxu0 0
  %780 = vmatpush1.bf16.msra.mxu0 %v737
  %781 = vmatprep.subr.bf16.mxu0 0
  %782 = vmatpush1.bf16.msra.mxu0 %v738
  %783 = vmatprep.subr.bf16.mxu0 0
  %784 = vmatpush1.bf16.msra.mxu0 %v739
  %785 = vmatprep.subr.bf16.mxu0 0
  %786 = vmatpush1.bf16.msra.mxu0 %v740
  %787 = vmatprep.subr.bf16.mxu0 0
  %788 = vmatpush1.bf16.msra.mxu0 %v741
  %789 = vmatprep.subr.bf16.mxu0 0
  %790 = vmatpush1.bf16.msra.mxu0 %v742
  %791 = vmatprep.mubr.bf16.mxu0 %v662
  %792 = vmatmul.mubr.bf16.gmra.mrb[0].mxu0 %v661
  %v793 = vpop.f32.mrb[0].mxu0
  %v794 = vadd.f32 0.0, %v793
  %v795 = vpop.f32.mrb[0].mxu0
  %v796 = vpop.f32.mrb[0].mxu0
  %v797 = vpop.f32.mrb[0].mxu0
  %798 = vdwg.mxu0
  %v799 = vadd.f32 %v575, %v794
  %v800 = vld [vmem:[%s4] sm:$0x1]
  %v802 = vlaneseq
  %v803 = vshrl.u32 %v802, 7
  %v804 = vsub.s32 0, %v803
  %v805 = vrot.slane %v800, %v804
  %v807 = vadd.f32 %v799, %v805
  %vm808 = vcmp.ge.f32.partialorder %v807, 0.0
  %v809 = vmul.f32 %v807, 0.01
  %v810 = vsel %vm808, %v807, %v809
  %v811 = vld [vmem:[%s5] sm:$0xf]
  %v812 = vld [vmem:[%s5 + $0x4] sm:$0xf]
  %v813 = vld [vmem:[%s5 + $0x8] sm:$0xf]
  %v814 = vld [vmem:[%s5 + $0xc] sm:$0xf]
  %v815 = vld [vmem:[%s5 + $0x10] sm:$0xf]
  %v816 = vld [vmem:[%s5 + $0x14] sm:$0xf]
  %v817 = vld [vmem:[%s5 + $0x18] sm:$0xf]
  %v818 = vld [vmem:[%s5 + $0x1c] sm:$0xf]
  %v819 = vpack.c.bf16 %v810, %v810
  %v820 = vld [vmem:[%s6] sm:$0x1]
  %v822 = vlaneseq
  %v823 = vshrl.u32 %v822, 7
  %v824 = vsub.s32 0, %v823
  %v825 = vrot.slane %v820, %v824
  %v835 = vunpack.c.l.b16 %v811
  %v836 = vunpack.c.l.b16 %v812
  %v837 = vunpack.c.l.b16 %v813
  %v838 = vunpack.c.l.b16 %v814
  %v839 = vunpack.c.l.b16 %v815
  %v840 = vunpack.c.l.b16 %v816
  %v841 = vunpack.c.l.b16 %v817
  %v842 = vunpack.c.l.b16 %v818
  %v843 = vpack.c.b16 %v836, %v835
  %v844 = vpack.c.b16 %v838, %v837
  %v845 = vpack.c.b16 %v840, %v839
  %v846 = vpack.c.b16 %v842, %v841
  %vm851 = vcmask 523264
  %v853 = vsel %vm851, %v819, 0
  %855 = vmatprep.subr.bf16.mxu0 0
  %856 = vmatpush1.bf16.msra.mxu0 %v843
  %857 = vmatprep.subr.bf16.mxu0 0
  %858 = vmatpush1.bf16.msra.mxu0 %v844
  %859 = vmatprep.subr.bf16.mxu0 0
  %860 = vmatpush1.bf16.msra.mxu0 %v845
  %861 = vmatprep.subr.bf16.mxu0 0
  %862 = vmatpush1.bf16.msra.mxu0 %v846
  %863 = vmatprep.subr.bf16.mxu0 0
  %864 = vmatpush1.bf16.msra.mxu0 0
  %865 = vmatprep.subr.bf16.mxu0 0
  %866 = vmatpush1.bf16.msra.mxu0 0
  %867 = vmatprep.subr.bf16.mxu0 0
  %868 = vmatpush1.bf16.msra.mxu0 0
  %869 = vmatprep.subr.bf16.mxu0 0
  %870 = vmatpush1.bf16.msra.mxu0 0
  %871 = vmatprep.subr.bf16.mxu0 0
  %872 = vmatpush1.bf16.msra.mxu0 0
  %873 = vmatprep.subr.bf16.mxu0 0
  %874 = vmatpush1.bf16.msra.mxu0 0
  %875 = vmatprep.subr.bf16.mxu0 0
  %876 = vmatpush1.bf16.msra.mxu0 0
  %877 = vmatprep.subr.bf16.mxu0 0
  %878 = vmatpush1.bf16.msra.mxu0 0
  %879 = vmatprep.subr.bf16.mxu0 0
  %880 = vmatpush1.bf16.msra.mxu0 0
  %881 = vmatprep.subr.bf16.mxu0 0
  %882 = vmatpush1.bf16.msra.mxu0 0
  %883 = vmatprep.subr.bf16.mxu0 0
  %884 = vmatpush1.bf16.msra.mxu0 0
  %885 = vmatprep.subr.bf16.mxu0 0
  %886 = vmatpush1.bf16.msra.mxu0 0
  %887 = vmatprep.mubr.bf16.mxu0 0
  %888 = vmatmul.mubr.bf16.gmra.mrb[0].mxu0 %v853
  %v889 = vpop.f32.mrb[0].mxu0
  %v890 = vadd.f32 %v825, %v889
  %v891 = vpop.f32.mrb[0].mxu0
  %v892 = vpop.f32.mrb[0].mxu0
  %v893 = vpop.f32.mrb[0].mxu0
  %894 = vdwg.mxu0
  %vm895 = vcmp.ge.f32.partialorder %v890, 0.0
  %v896 = vmul.f32 %v890, 0.01
  %v897 = vsel %vm895, %v890, %v896
  %v898 = vld [vmem:[%s7] sm:$0x1]
  %v900 = vlaneseq
  %v901 = vshrl.u32 %v900, 7
  %v902 = vsub.s32 0, %v901
  %v903 = vrot.slane %v898, %v902
  %v905 = vmul.f32 %v897, %v903
  %v906 = vsel %vm851, %v905, 0.0
  %907 = vadd.xlane.f32.xlu0 %v906
  %v908 = vpop.xlane.xlu0 %907
  %v909 = vld [vmem:[#allocation2] sm:$0x1]
  %v911 = vlaneseq
  %v912 = vshrl.u32 %v911, 7
  %v913 = vsub.s32 0, %v912
  %v914 = vrot.slane %v909, %v913
  %v916 = vadd.f32 %v908, %v914
  %v917 = vtanh.pop %v916
  %vm918 = vcmask 7168
  %919 = vst.msk [vmem:[%s9] sm:$0xff] %vm918, %v917
  // Predicated region
  $region38: #{architecture1_forward.1} parent=0 // pred_check
    _
  $region39: #{architecture1_forward.1} parent=0 // pred_check_branch
    %921 = sbr.rel (0) target = $region41
  $region40: #{architecture1_forward.1} parent=0 // pred_region
    _
  $region41: #{architecture1_forward.1} parent=0 // pred_fallthru
    _
  // Predicated region
  $region42: #{architecture1_forward.1} parent=0 // pred_check
    _
  $region43: #{architecture1_forward.1} parent=0 // pred_check_branch
    %923 = sbr.rel (0) target = $region45
  $region44: #{architecture1_forward.1} parent=0 // pred_region
    _
  $region45: #{architecture1_forward.1} parent=0 // pred_fallthru
    _

</llo_original>
